<compile_context>
chip_gen: v7x
topology: tpu7x:2x2x1
jax: 0.10.0
libtpu: 0.0.40
codegen_flags: <defaults>
</compile_context>

<pallas_src>
import functools

import jax
import jax.numpy as jnp
from jax.experimental import pallas as pl
from jax.experimental.pallas import tpu as pltpu

HIDDEN_SIZE = 64
LOG_STD_MIN = -20.0
LOG_STD_MAX = 2.0

_LANES = 128     # lane width of the packed param slab
_HP = 128        # hidden size padded to full MXU lane width
_SUBLANE = 8
_MAX_TB = 4096   # batch-tile cap (double-buffered working set ~8.4 MiB)
_MIN_SPLIT = 1024  # padded batch size above which we force >=2 grid steps


def _round_up(x, m):
    return (x + m - 1) // m * m


# ---------------------------------------------------------------------------
# Kernel
# ---------------------------------------------------------------------------
def _policy_kernel(x_ref, p_ref, out_ref, *, sp, action_dim):
    """relu(x@W1+b1) -> relu(@W2+b2) -> fused heads -> [mu | clip(log_std)]."""
    x = x_ref[...]                                            # (TB, sp)
    cd = x.dtype                                              # MXU operand dtype

    # Static slices of the single packed parameter slab (all sublane-aligned).
    w1 = p_ref[pl.ds(0, sp), :]                               # (sp, 128)
    w2 = p_ref[pl.ds(sp, _HP), :]                             # (128, 128)
    wh = p_ref[pl.ds(sp + _HP, _HP), :]                       # (128, 128)
    bias = p_ref[pl.ds(sp + 2 * _HP, _SUBLANE), :]            # (8, 128)
    b1 = bias[0:1, :]
    b2 = bias[1:2, :]
    bh = bias[2:3, :]

    h1 = jnp.maximum(jnp.dot(x, w1, preferred_element_type=jnp.float32) + b1, 0.0)
    h2 = jnp.maximum(
        jnp.dot(h1.astype(cd), w2, preferred_element_type=jnp.float32) + b2, 0.0)
    heads = jnp.dot(h2.astype(cd), wh, preferred_element_type=jnp.float32) + bh

    # lanes [0, A)  : mu          (passed through)
    # lanes [A, 2A) : log_std     -> clamp (exp happens in the wrapper)
    heads = heads[:, : 2 * action_dim]                        # (TB, 2A)
    lane = jax.lax.broadcasted_iota(jnp.int32, heads.shape, 1)
    clipped = jnp.clip(heads, LOG_STD_MIN, LOG_STD_MAX)
    out_ref[...] = jnp.where(lane >= action_dim, clipped, heads).astype(out_ref.dtype)


# ---------------------------------------------------------------------------
# pallas_call builder (cached per shape)
# ---------------------------------------------------------------------------
@functools.lru_cache(maxsize=None)
def _build_policy_call(bp, tb, sp, slab_rows, action_dim):
    kernel = functools.partial(_policy_kernel, sp=sp, action_dim=action_dim)
    out_w = 2 * action_dim
    flops = 2 * bp * (sp * _HP + _HP * _HP + _HP * _HP)
    cost = pl.CostEstimate(
        flops=flops,
        transcendentals=0,
        bytes_accessed=4 * (bp * sp + slab_rows * _LANES + bp * out_w),
    )
    return pl.pallas_call(
        kernel,
        out_shape=jax.ShapeDtypeStruct((bp, out_w), jnp.float32),
        grid_spec=pltpu.PrefetchScalarGridSpec(
            num_scalar_prefetch=0,
            grid=(bp // tb,),
            in_specs=[
                pl.BlockSpec((tb, sp), lambda i: (i, 0)),             # batch tile
                pl.BlockSpec((slab_rows, _LANES), lambda i: (0, 0)),  # resident params
            ],
            out_specs=pl.BlockSpec((tb, out_w), lambda i: (i, 0)),
        ),
        compiler_params=pltpu.CompilerParams(
            dimension_semantics=("parallel",),
            vmem_limit_bytes=32 * 1024 * 1024,
        ),
        cost_estimate=cost,
    )


# ---------------------------------------------------------------------------
# Wrapper
# ---------------------------------------------------------------------------
@functools.partial(jax.jit, static_argnames=("state_dim", "action_dim"))
def policy_forward(x, param_slab, *, state_dim, action_dim):
    """Fused PolicyNetwork forward. Returns (mu, std)."""
    b = x.shape[0]
    sp = _round_up(state_dim, _SUBLANE)
    bp = _round_up(b, _SUBLANE)

    # Near-equal tiles; >=2 (even) grid steps at large batch so both v7x
    # TensorCores get work; at most n_tiles*7 dead rows of rounding.
    n_tiles = max(pl.cdiv(bp, _MAX_TB), 2 if bp >= _MIN_SPLIT else 1)
    if n_tiles > 1 and n_tiles % 2:
        n_tiles += 1
    tb = _round_up(pl.cdiv(bp, n_tiles), _SUBLANE)
    bp = n_tiles * tb

    cd = param_slab.dtype                     # compute dtype (f32 or bf16 fast path)
    if bp != b or sp != state_dim:
        xp = jnp.zeros((bp, sp), cd).at[:b, :state_dim].set(x.astype(cd))
    else:
        xp = x.astype(cd)                     # no pad copy in the common aligned case

    fn = _build_policy_call(bp, tb, sp, param_slab.shape[0], action_dim)
    out = fn(xp, param_slab)                  # (bp, 2A): [mu | clipped log_std]

    mu = out[:b, :action_dim]
    std = jnp.exp(out[:b, action_dim:2 * action_dim])   # fuses with the slice copy
    return mu, std


# ---------------------------------------------------------------------------
# Parameters
# ---------------------------------------------------------------------------
def init_params(key, state_dim, action_dim):
    """PyTorch-Linear-style uniform init; weights stored as (in, out)."""
    def linear(k, fan_in, fan_out):
        kw, kb = jax.random.split(k)
        bound = 1.0 / jnp.sqrt(jnp.float32(fan_in))
        w = jax.random.uniform(kw, (fan_in, fan_out), jnp.float32, -bound, bound)
        b = jax.random.uniform(kb, (fan_out,), jnp.float32, -bound, bound)
        return w, b

    k1, k2, k3, k4 = jax.random.split(key, 4)
    w1, b1 = linear(k1, state_dim, HIDDEN_SIZE)
    w2, b2 = linear(k2, HIDDEN_SIZE, HIDDEN_SIZE)
    wmu, bmu = linear(k3, HIDDEN_SIZE, action_dim)
    wls, bls = linear(k4, HIDDEN_SIZE, action_dim)
    return (w1, b1, w2, b2, wmu, bmu, wls, bls)


def pack_params(params, state_dim, action_dim, dtype=jnp.float32):
    """Pack all weights/biases into ONE lane-dense (rows, 128) slab.

    Layout (rows):
      [0, sp)             W1  zero-padded to (sp, 128)
      [sp, sp+128)        W2  zero-padded to (128, 128)
      [sp+128, sp+256)    [Wmu | Wls] fused head, zero-padded to (128, 128)
      [sp+256, sp+264)    bias block: row0=b1, row1=b2, row2=[bmu|bls]
    Zero padding of the hidden dim is inert through ReLU, so results match
    the unpadded network exactly.  dtype=bf16 gives the optional fast path
    for v6e/v7x (f32 accumulation preserved via preferred_element_type).
    """
    w1, b1, w2, b2, wmu, bmu, wls, bls = params
    assert 2 * action_dim <= _LANES, "fused heads must fit in 128 lanes"
    sp = _round_up(state_dim, _SUBLANE)

    def pad2(a, rows):
        return jnp.zeros((rows, _LANES), jnp.float32).at[:a.shape[0], :a.shape[1]].set(a)

    wh = jnp.concatenate([wmu, wls], axis=1)      # (64, 2*A)
    bh = jnp.concatenate([bmu, bls], axis=0)      # (2*A,)
    bias_blk = (jnp.zeros((_SUBLANE, _LANES), jnp.float32)
                .at[0, :b1.shape[0]].set(b1)
                .at[1, :b2.shape[0]].set(b2)
                .at[2, :bh.shape[0]].set(bh))
    slab = jnp.concatenate(
        [pad2(w1, sp), pad2(w2, _HP), pad2(wh, _HP), bias_blk], axis=0)
    return slab.astype(dtype)


def _reference_forward(x, params):
    """Plain-JAX reference for correctness checking."""
    w1, b1, w2, b2, wmu, bmu, wls, bls = params
    h1 = jnp.maximum(x @ w1 + b1, 0.0)
    h2 = jnp.maximum(h1 @ w2 + b2, 0.0)
    mu = h2 @ wmu + bmu
    ls = jnp.clip(h2 @ wls + bls, LOG_STD_MIN, LOG_STD_MAX)
    return mu, jnp.exp(ls)


if __name__ == "__main__":
    key = jax.random.PRNGKey(0)
    k_params, k_x = jax.random.split(key)

    B = 2            # batch
    STATE_DIM = 8    # observation dimension
    ACTION_DIM = 4   # action dimension

    params = init_params(k_params, STATE_DIM, ACTION_DIM)
    slab = pack_params(params, STATE_DIM, ACTION_DIM)          # f32 default path
    x = jax.random.normal(k_x, (B, STATE_DIM), jnp.float32)

    mu, std = policy_forward(x, slab, state_dim=STATE_DIM, action_dim=ACTION_DIM)
    jax.block_until_ready((mu, std))

    mu_ref, std_ref = _reference_forward(x, params)
    assert mu.shape == (B, ACTION_DIM) and std.shape == (B, ACTION_DIM)
    assert jnp.allclose(mu, mu_ref, atol=1e-5, rtol=1e-5)
    assert jnp.allclose(std, std_ref, atol=1e-5, rtol=1e-5)
    assert bool(jnp.all(std > 0.0))

    # TODO(synk): PolicyNetwork.sample() (rsample + tanh squash + log_prob) and
    # the Adam optimizer are stochastic/training code outside forward(); not
    # implemented in-kernel.

    print("KERNEL_OK")
</pallas_src>

<mosaic_0001>
module attributes {stable_mosaic.version = 11 : i64} {
  func.func @_policy_kernel(%arg0: i32, %arg1: memref<8x8xf32, #tpu.memory_space<vmem>>, %arg2: memref<272x128xf32, #tpu.memory_space<vmem>>, %arg3: memref<8x8xf32, #tpu.memory_space<vmem>>) attributes {dimension_semantics = [#tpu.dimension_semantics<parallel>], iteration_bounds = array<i64: 1>, scalar_prefetch = 0 : i64, scratch_operands = 0 : i64, tpu.core_type = #tpu.core_type<tc>, window_params = [{transform_indices = @transform_0, window_bounds = array<i64: 8, 8>}, {pipeline_mode = #tpu.pipeline_mode<synchronous>, transform_indices = @transform_1, window_bounds = array<i64: 272, 128>}, {transform_indices = @transform_2, window_bounds = array<i64: 8, 8>}]} {
    %c0 = arith.constant 0 : index
    %c0_0 = arith.constant 0 : index
    %0 = vector.load %arg1[%c0, %c0_0] : memref<8x8xf32, #tpu.memory_space<vmem>>, vector<8x8xf32>
    %c0_1 = arith.constant 0 : index
    %c0_2 = arith.constant 0 : index
    %1 = vector.load %arg2[%c0_1, %c0_2] : memref<272x128xf32, #tpu.memory_space<vmem>>, vector<8x128xf32>
    %c8 = arith.constant 8 : index
    %c0_3 = arith.constant 0 : index
    %2 = vector.load %arg2[%c8, %c0_3] : memref<272x128xf32, #tpu.memory_space<vmem>>, vector<128x128xf32>
    %c136 = arith.constant 136 : index
    %c0_4 = arith.constant 0 : index
    %3 = vector.load %arg2[%c136, %c0_4] : memref<272x128xf32, #tpu.memory_space<vmem>>, vector<128x128xf32>
    %c264 = arith.constant 264 : index
    %c0_5 = arith.constant 0 : index
    %4 = vector.load %arg2[%c264, %c0_5] : memref<272x128xf32, #tpu.memory_space<vmem>>, vector<8x128xf32>
    %5 = vector.extract_strided_slice %4 {offsets = [0, 0], sizes = [1, 128], strides = [1, 1]} : vector<8x128xf32> to vector<1x128xf32>
    %6 = vector.extract_strided_slice %4 {offsets = [1, 0], sizes = [1, 128], strides = [1, 1]} : vector<8x128xf32> to vector<1x128xf32>
    %7 = vector.extract_strided_slice %4 {offsets = [2, 0], sizes = [1, 128], strides = [1, 1]} : vector<8x128xf32> to vector<1x128xf32>
    %cst = arith.constant dense<0.000000e+00> : vector<8x128xf32>
    %8 = tpu.matmul %0, %1, %cst {dimension_numbers = #tpu.dot_dimension_numbers<[1], [0], [0], [1], [0, 0, 1, 1], [], []>} : vector<8x8xf32>, vector<8x128xf32>, vector<8x128xf32> -> vector<8x128xf32>
    %9 = vector.broadcast %5 : vector<1x128xf32> to vector<8x128xf32>
    %10 = arith.addf %8, %9 : vector<8x128xf32>
    %cst_6 = arith.constant 0.000000e+00 : f32
    %11 = vector.broadcast %cst_6 : f32 to vector<8x128xf32>
    %12 = arith.maximumf %10, %11 : vector<8x128xf32>
    %cst_7 = arith.constant dense<0.000000e+00> : vector<8x128xf32>
    %13 = tpu.matmul %12, %2, %cst_7 {dimension_numbers = #tpu.dot_dimension_numbers<[1], [0], [0], [1], [0, 0, 1, 1], [], []>} : vector<8x128xf32>, vector<128x128xf32>, vector<8x128xf32> -> vector<8x128xf32>
    %14 = vector.broadcast %6 : vector<1x128xf32> to vector<8x128xf32>
    %15 = arith.addf %13, %14 : vector<8x128xf32>
    %cst_8 = arith.constant 0.000000e+00 : f32
    %16 = vector.broadcast %cst_8 : f32 to vector<8x128xf32>
    %17 = arith.maximumf %15, %16 : vector<8x128xf32>
    %cst_9 = arith.constant dense<0.000000e+00> : vector<8x128xf32>
    %18 = tpu.matmul %17, %3, %cst_9 {dimension_numbers = #tpu.dot_dimension_numbers<[1], [0], [0], [1], [0, 0, 1, 1], [], []>} : vector<8x128xf32>, vector<128x128xf32>, vector<8x128xf32> -> vector<8x128xf32>
    %19 = vector.broadcast %7 : vector<1x128xf32> to vector<8x128xf32>
    %20 = arith.addf %18, %19 : vector<8x128xf32>
    %21 = vector.extract_strided_slice %20 {offsets = [0, 0], sizes = [8, 8], strides = [1, 1]} : vector<8x128xf32> to vector<8x8xf32>
    %22 = tpu.iota {dimensions = array<i32: 1>} : vector<8x8xi32>
    %cst_10 = arith.constant -2.000000e+01 : f32
    %cst_11 = arith.constant 2.000000e+00 : f32
    %23 = vector.broadcast %cst_10 : f32 to vector<8x8xf32>
    %24 = arith.maximumf %23, %21 : vector<8x8xf32>
    %25 = vector.broadcast %cst_11 : f32 to vector<8x8xf32>
    %26 = arith.minimumf %25, %24 : vector<8x8xf32>
    %c4_i32 = arith.constant 4 : i32
    %27 = vector.broadcast %c4_i32 : i32 to vector<8x8xi32>
    %28 = arith.cmpi sge, %22, %27 : vector<8x8xi32>
    %29 = arith.select %28, %26, %21 : vector<8x8xi1>, vector<8x8xf32>
    %c0_12 = arith.constant 0 : index
    %c0_13 = arith.constant 0 : index
    %30 = vector.load %arg3[%c0_12, %c0_13] : memref<8x8xf32, #tpu.memory_space<vmem>>, vector<8x8xf32>
    tpu.vector_store %arg3[%c0_12, %c0_13], %29 {strides = array<i32>} : memref<8x8xf32, #tpu.memory_space<vmem>>, vector<8x8xf32>,
    return
  }
  func.func @transform_0(%arg0: i32) -> (i32, i32) {
    %c0_i32 = arith.constant 0 : i32
    %c0_i32_0 = arith.constant 0 : i32
    return %arg0, %c0_i32 : i32, i32
  }
  func.func @transform_1(%arg0: i32) -> (i32, i32) {
    %c0_i32 = arith.constant 0 : i32
    %c0_i32_0 = arith.constant 0 : i32
    %c0_i32_1 = arith.constant 0 : i32
    return %c0_i32, %c0_i32_0 : i32, i32
  }
  func.func @transform_2(%arg0: i32) -> (i32, i32) {
    %c0_i32 = arith.constant 0 : i32
    %c0_i32_0 = arith.constant 0 : i32
    return %arg0, %c0_i32 : i32, i32
  }
}

</mosaic_0001>

<llo_original>
// kernel: policy_forward.1
$region0: #{policy_forward.1}
  #allocation0 [shape = 'u32[]', space=smem, size = 0x4, offset = 0x4, fixed_abs, tag = 'smem constant byte address 0x4 - core index']
  #allocation1 [shape = 'u32[144,128]{1,0:T(1,128)}', space=vmem, size = 0x12000, scoped, tag = 'internal scratch']
  %s0 = inlined_call_operand.vmem [shape: f32[8,8], index: 0, kind: input, shape index: {}]
  %s1 = inlined_call_operand.hbm [shape: f32[272,128], index: 1, kind: input, shape index: {}]
  %s2 = inlined_call_operand.vmem [shape: f32[8,8], index: 2, kind: output, shape index: {}]
  %s3 = sld [smem:[#allocation0]]
  $region22: #{policy_forward.1} parent=0
    _
  %s5 = ssub.s32 1, %s3
  %s6 = scalar_select 0, %s5, %s3
  $region1: #{policy_forward.1} parent=0
    #allocation2 [shape = 'u8[139264]{0}', space=vmem, size = 0x22000, scoped, tag = 'input window, operand 1, single buffered']
    #allocation3 [shape = 's32[1]{0}', space=sflag, size = 0x4, scoped, tag = 'scoped memory for policy_forward.1']
    %7 = vsyncpa [#allocation3], 0
    // Predicated region
    $region2: #{policy_forward.1} parent=1 // pred_check
      _
    $region3: #{policy_forward.1} parent=1 // pred_check_branch
      %9 = sbr.rel (0) target = $region5
    $region4: #{policy_forward.1} parent=1 // pred_region
      _
    $region5: #{policy_forward.1} parent=1 // pred_fallthru
      _
    // Predicated region
    $region6: #{policy_forward.1} parent=1 // pred_check
      _
    $region7: #{policy_forward.1} parent=1 // pred_check_branch
      %11 = sbr.rel (0) target = $region9
    $region8: #{policy_forward.1} parent=1 // pred_region
      %s13 = ssub.s32 4352, 4352
      %14 = vsyncadd [#allocation3], %s13
      %s15 = sshll.u32 [#allocation2], 4
      %s16 = int_to_ptr.vmem [resolvable:$true] %s15
      %21 = dma.hbm_to_vmem [thread:$0]  %s1, 4352, %s16, [#allocation3], 128, 128, 8
    $region9: #{policy_forward.1} parent=1 // pred_fallthru
      _
    // Predicated region
    $region10: #{policy_forward.1} parent=1 // pred_check
      _
    $region11: #{policy_forward.1} parent=1 // pred_check_branch
      %23 = sbr.rel (0) target = $region13
    $region12: #{policy_forward.1} parent=1 // pred_region
      %24 = dma.done [#allocation3], 4352
    $region13: #{policy_forward.1} parent=1 // pred_fallthru
      _
    %v25 = vld [vmem:[%s0] sm:$0xff]
    %v26 = vld [vmem:[#allocation2] sm:$0xff]
    %v27 = vld [vmem:[#allocation2 + $0x8] sm:$0xff]
    %v28 = vld [vmem:[#allocation2 + $0x10] sm:$0xff]
    %v29 = vld [vmem:[#allocation2 + $0x18] sm:$0xff]
    %v30 = vld [vmem:[#allocation2 + $0x20] sm:$0xff]
    %v31 = vld [vmem:[#allocation2 + $0x28] sm:$0xff]
    %v32 = vld [vmem:[#allocation2 + $0x30] sm:$0xff]
    %v33 = vld [vmem:[#allocation2 + $0x38] sm:$0xff]
    %v34 = vld [vmem:[#allocation2 + $0x40] sm:$0xff]
    %v35 = vld [vmem:[#allocation2 + $0x48] sm:$0xff]
    %v36 = vld [vmem:[#allocation2 + $0x50] sm:$0xff]
    %v37 = vld [vmem:[#allocation2 + $0x58] sm:$0xff]
    %v38 = vld [vmem:[#allocation2 + $0x60] sm:$0xff]
    %v39 = vld [vmem:[#allocation2 + $0x68] sm:$0xff]
    %v40 = vld [vmem:[#allocation2 + $0x70] sm:$0xff]
    %v41 = vld [vmem:[#allocation2 + $0x78] sm:$0xff]
    %v42 = vld [vmem:[#allocation2 + $0x80] sm:$0xff]
    %v43 = vld [vmem:[#allocation2 + $0x88] sm:$0xff]
    %v44 = vld [vmem:[#allocation2 + $0x90] sm:$0xff]
    %v45 = vld [vmem:[#allocation2 + $0x98] sm:$0xff]
    %v46 = vld [vmem:[#allocation2 + $0xa0] sm:$0xff]
    %v47 = vld [vmem:[#allocation2 + $0xa8] sm:$0xff]
    %v48 = vld [vmem:[#allocation2 + $0xb0] sm:$0xff]
    %v49 = vld [vmem:[#allocation2 + $0xb8] sm:$0xff]
    %v50 = vld [vmem:[#allocation2 + $0xc0] sm:$0xff]
    %v51 = vld [vmem:[#allocation2 + $0xc8] sm:$0xff]
    %v52 = vld [vmem:[#allocation2 + $0xd0] sm:$0xff]
    %v53 = vld [vmem:[#allocation2 + $0xd8] sm:$0xff]
    %v54 = vld [vmem:[#allocation2 + $0xe0] sm:$0xff]
    %v55 = vld [vmem:[#allocation2 + $0xe8] sm:$0xff]
    %v56 = vld [vmem:[#allocation2 + $0xf0] sm:$0xff]
    %v57 = vld [vmem:[#allocation2 + $0xf8] sm:$0xff]
    %v58 = vld [vmem:[#allocation2 + $0x100] sm:$0xff]
    %v59 = vld [vmem:[#allocation2 + $0x108] sm:$0xff]
    %v60 = vlaneseq
    %v61 = vshrl.u32 %v60, 7
    %v62 = vsub.s32 0, %v61
    %v63 = vrot.slane %v59, %v62
    %vm64 = vcmask 64512
    %v66 = vsel %vm64, %v25, 0
    %68 = vmatprep.subr.mxu0 0.0
    %69 = vmatpush1.msra.mxu0 %v26
    %70 = vmatprep.subr.mxu0 0.0
    %71 = vmatpush1.msra.mxu0 0.0
    %72 = vmatprep.subr.mxu0 0.0
    %73 = vmatpush1.msra.mxu0 0.0
    %74 = vmatprep.subr.mxu0 0.0
    %75 = vmatpush1.msra.mxu0 0.0
    %76 = vmatprep.subr.mxu0 0.0
    %77 = vmatpush1.msra.mxu0 0.0
    %78 = vmatprep.subr.mxu0 0.0
    %79 = vmatpush1.msra.mxu0 0.0
    %80 = vmatprep.subr.mxu0 0.0
    %81 = vmatpush1.msra.mxu0 0.0
    %82 = vmatprep.subr.mxu0 0.0
    %83 = vmatpush1.msra.mxu0 0.0
    %84 = vmatprep.subr.mxu0 0.0
    %85 = vmatpush1.msra.mxu0 0.0
    %86 = vmatprep.subr.mxu0 0.0
    %87 = vmatpush1.msra.mxu0 0.0
    %88 = vmatprep.subr.mxu0 0.0
    %89 = vmatpush1.msra.mxu0 0.0
    %90 = vmatprep.subr.mxu0 0.0
    %91 = vmatpush1.msra.mxu0 0.0
    %92 = vmatprep.subr.mxu0 0.0
    %93 = vmatpush1.msra.mxu0 0.0
    %94 = vmatprep.subr.mxu0 0.0
    %95 = vmatpush1.msra.mxu0 0.0
    %96 = vmatprep.subr.mxu0 0.0
    %97 = vmatpush1.msra.mxu0 0.0
    %98 = vmatprep.subr.mxu0 0.0
    %99 = vmatpush1.msra.mxu0 0.0
    %100 = vmatprep.subr.mxu0 0.0
    %101 = vmatpush1.msra.mxu0 0.0
    %102 = vmatprep.subr.mxu0 0.0
    %103 = vmatpush1.msra.mxu0 0.0
    %104 = vmatprep.subr.mxu0 0.0
    %105 = vmatpush1.msra.mxu0 0.0
    %106 = vmatprep.subr.mxu0 0.0
    %107 = vmatpush1.msra.mxu0 0.0
    %108 = vmatprep.subr.mxu0 0.0
    %109 = vmatpush1.msra.mxu0 0.0
    %110 = vmatprep.subr.mxu0 0.0
    %111 = vmatpush1.msra.mxu0 0.0
    %112 = vmatprep.subr.mxu0 0.0
    %113 = vmatpush1.msra.mxu0 0.0
    %114 = vmatprep.subr.mxu0 0.0
    %115 = vmatpush1.msra.mxu0 0.0
    %116 = vmatprep.subr.mxu0 0.0
    %117 = vmatpush1.msra.mxu0 0.0
    %118 = vmatprep.subr.mxu0 0.0
    %119 = vmatpush1.msra.mxu0 0.0
    %120 = vmatprep.subr.mxu0 0.0
    %121 = vmatpush1.msra.mxu0 0.0
    %122 = vmatprep.subr.mxu0 0.0
    %123 = vmatpush1.msra.mxu0 0.0
    %124 = vmatprep.subr.mxu0 0.0
    %125 = vmatpush1.msra.mxu0 0.0
    %126 = vmatprep.subr.mxu0 0.0
    %127 = vmatpush1.msra.mxu0 0.0
    %128 = vmatprep.subr.mxu0 0.0
    %129 = vmatpush1.msra.mxu0 0.0
    %130 = vmatprep.subr.mxu0 0.0
    %131 = vmatpush1.msra.mxu0 0.0
    %132 = vmatprep.mubr.f32.mxu0 0.0
    %133 = vmatmul.mubr.f32.gmra.mrb[0].mxu0 %v66
    %v134 = vpop.f32.mrb[0].mxu0
    %v135 = vadd.f32 %v63, %v134
    %v136 = vpop.f32.mrb[0].mxu0
    %137 = vdwg.mxu0
    %v138 = vmax.f32 %v135, 0.0
    %v139 = vlaneseq
    %v140 = vshrl.u32 %v139, 7
    %v141 = vsub.s32 1, %v140
    %v142 = vrot.slane %v59, %v141
    %143 = vmatprep.subr.mxu0 0.0
    %144 = vmatpush1.msra.mxu0 %v27
    %145 = vmatprep.subr.mxu0 0.0
    %146 = vmatpush1.msra.mxu0 %v28
    %147 = vmatprep.subr.mxu0 0.0
    %148 = vmatpush1.msra.mxu0 %v29
    %149 = vmatprep.subr.mxu0 0.0
    %150 = vmatpush1.msra.mxu0 %v30
    %151 = vmatprep.subr.mxu0 0.0
    %152 = vmatpush1.msra.mxu0 %v31
    %153 = vmatprep.subr.mxu0 0.0
    %154 = vmatpush1.msra.mxu0 %v32
    %155 = vmatprep.subr.mxu0 0.0
    %156 = vmatpush1.msra.mxu0 %v33
    %157 = vmatprep.subr.mxu0 0.0
    %158 = vmatpush1.msra.mxu0 %v34
    %159 = vmatprep.subr.mxu0 0.0
    %160 = vmatpush1.msra.mxu0 %v35
    %161 = vmatprep.subr.mxu0 0.0
    %162 = vmatpush1.msra.mxu0 %v36
    %163 = vmatprep.subr.mxu0 0.0
    %164 = vmatpush1.msra.mxu0 %v37
    %165 = vmatprep.subr.mxu0 0.0
    %166 = vmatpush1.msra.mxu0 %v38
    %167 = vmatprep.subr.mxu0 0.0
    %168 = vmatpush1.msra.mxu0 %v39
    %169 = vmatprep.subr.mxu0 0.0
    %170 = vmatpush1.msra.mxu0 %v40
    %171 = vmatprep.subr.mxu0 0.0
    %172 = vmatpush1.msra.mxu0 %v41
    %173 = vmatprep.subr.mxu0 0.0
    %174 = vmatpush1.msra.mxu0 %v42
    %175 = vmatprep.subr.mxu0 0.0
    %176 = vmatpush1.msra.mxu0 0.0
    %177 = vmatprep.subr.mxu0 0.0
    %178 = vmatpush1.msra.mxu0 0.0
    %179 = vmatprep.subr.mxu0 0.0
    %180 = vmatpush1.msra.mxu0 0.0
    %181 = vmatprep.subr.mxu0 0.0
    %182 = vmatpush1.msra.mxu0 0.0
    %183 = vmatprep.subr.mxu0 0.0
    %184 = vmatpush1.msra.mxu0 0.0
    %185 = vmatprep.subr.mxu0 0.0
    %186 = vmatpush1.msra.mxu0 0.0
    %187 = vmatprep.subr.mxu0 0.0
    %188 = vmatpush1.msra.mxu0 0.0
    %189 = vmatprep.subr.mxu0 0.0
    %190 = vmatpush1.msra.mxu0 0.0
    %191 = vmatprep.subr.mxu0 0.0
    %192 = vmatpush1.msra.mxu0 0.0
    %193 = vmatprep.subr.mxu0 0.0
    %194 = vmatpush1.msra.mxu0 0.0
    %195 = vmatprep.subr.mxu0 0.0
    %196 = vmatpush1.msra.mxu0 0.0
    %197 = vmatprep.subr.mxu0 0.0
    %198 = vmatpush1.msra.mxu0 0.0
    %199 = vmatprep.subr.mxu0 0.0
    %200 = vmatpush1.msra.mxu0 0.0
    %201 = vmatprep.subr.mxu0 0.0
    %202 = vmatpush1.msra.mxu0 0.0
    %203 = vmatprep.subr.mxu0 0.0
    %204 = vmatpush1.msra.mxu0 0.0
    %205 = vmatprep.subr.mxu0 0.0
    %206 = vmatpush1.msra.mxu0 0.0
    %207 = vmatprep.mubr.f32.mxu0 0.0
    %208 = vmatmul.mubr.f32.gmra.mrb[0].mxu0 %v138
    %v209 = vpop.f32.mrb[0].mxu0
    %v210 = vadd.f32 %v142, %v209
    %v211 = vpop.f32.mrb[0].mxu0
    %212 = vdwg.mxu0
    %v213 = vmax.f32 %v210, 0.0
    %v214 = vlaneseq
    %v215 = vshrl.u32 %v214, 7
    %v216 = vsub.s32 2, %v215
    %v217 = vrot.slane %v59, %v216
    %218 = vmatprep.subr.mxu0 0.0
    %219 = vmatpush1.msra.mxu0 %v43
    %220 = vmatprep.subr.mxu0 0.0
    %221 = vmatpush1.msra.mxu0 %v44
    %222 = vmatprep.subr.mxu0 0.0
    %223 = vmatpush1.msra.mxu0 %v45
    %224 = vmatprep.subr.mxu0 0.0
    %225 = vmatpush1.msra.mxu0 %v46
    %226 = vmatprep.subr.mxu0 0.0
    %227 = vmatpush1.msra.mxu0 %v47
    %228 = vmatprep.subr.mxu0 0.0
    %229 = vmatpush1.msra.mxu0 %v48
    %230 = vmatprep.subr.mxu0 0.0
    %231 = vmatpush1.msra.mxu0 %v49
    %232 = vmatprep.subr.mxu0 0.0
    %233 = vmatpush1.msra.mxu0 %v50
    %234 = vmatprep.subr.mxu0 0.0
    %235 = vmatpush1.msra.mxu0 %v51
    %236 = vmatprep.subr.mxu0 0.0
    %237 = vmatpush1.msra.mxu0 %v52
    %238 = vmatprep.subr.mxu0 0.0
    %239 = vmatpush1.msra.mxu0 %v53
    %240 = vmatprep.subr.mxu0 0.0
    %241 = vmatpush1.msra.mxu0 %v54
    %242 = vmatprep.subr.mxu0 0.0
    %243 = vmatpush1.msra.mxu0 %v55
    %244 = vmatprep.subr.mxu0 0.0
    %245 = vmatpush1.msra.mxu0 %v56
    %246 = vmatprep.subr.mxu0 0.0
    %247 = vmatpush1.msra.mxu0 %v57
    %248 = vmatprep.subr.mxu0 0.0
    %249 = vmatpush1.msra.mxu0 %v58
    %250 = vmatprep.subr.mxu0 0.0
    %251 = vmatpush1.msra.mxu0 0.0
    %252 = vmatprep.subr.mxu0 0.0
    %253 = vmatpush1.msra.mxu0 0.0
    %254 = vmatprep.subr.mxu0 0.0
    %255 = vmatpush1.msra.mxu0 0.0
    %256 = vmatprep.subr.mxu0 0.0
    %257 = vmatpush1.msra.mxu0 0.0
    %258 = vmatprep.subr.mxu0 0.0
    %259 = vmatpush1.msra.mxu0 0.0
    %260 = vmatprep.subr.mxu0 0.0
    %261 = vmatpush1.msra.mxu0 0.0
    %262 = vmatprep.subr.mxu0 0.0
    %263 = vmatpush1.msra.mxu0 0.0
    %264 = vmatprep.subr.mxu0 0.0
    %265 = vmatpush1.msra.mxu0 0.0
    %266 = vmatprep.subr.mxu0 0.0
    %267 = vmatpush1.msra.mxu0 0.0
    %268 = vmatprep.subr.mxu0 0.0
    %269 = vmatpush1.msra.mxu0 0.0
    %270 = vmatprep.subr.mxu0 0.0
    %271 = vmatpush1.msra.mxu0 0.0
    %272 = vmatprep.subr.mxu0 0.0
    %273 = vmatpush1.msra.mxu0 0.0
    %274 = vmatprep.subr.mxu0 0.0
    %275 = vmatpush1.msra.mxu0 0.0
    %276 = vmatprep.subr.mxu0 0.0
    %277 = vmatpush1.msra.mxu0 0.0
    %278 = vmatprep.subr.mxu0 0.0
    %279 = vmatpush1.msra.mxu0 0.0
    %280 = vmatprep.subr.mxu0 0.0
    %281 = vmatpush1.msra.mxu0 0.0
    %282 = vmatprep.mubr.f32.mxu0 0.0
    %283 = vmatmul.mubr.f32.gmra.mrb[0].mxu0 %v213
    %v284 = vpop.f32.mrb[0].mxu0
    %v285 = vadd.f32 %v217, %v284
    %v286 = vpop.f32.mrb[0].mxu0
    %287 = vdwg.mxu0
    %v288 = vlaneseq
    %v289 = vand.u32 %v288, 127
    %v290 = vmax.f32 %v285, -20.0
    %v291 = vmin.f32 %v290, 2.0
    %vm292 = vcmp.ge.s32.totalorder %v289, 4
    %v293 = vsel %vm292, %v291, %v285
    %294 = vst.msk [vmem:[%s2] sm:$0xff] %vm64, %v293
    // Predicated region
    $region14: #{policy_forward.1} parent=1 // pred_check
      _
    $region15: #{policy_forward.1} parent=1 // pred_check_branch
      %296 = sbr.rel (0) target = $region17
    $region16: #{policy_forward.1} parent=1 // pred_region
      _
    $region17: #{policy_forward.1} parent=1 // pred_fallthru
      _
    // Predicated region
    $region18: #{policy_forward.1} parent=1 // pred_check
      _
    $region19: #{policy_forward.1} parent=1 // pred_check_branch
      %298 = sbr.rel (0) target = $region21
    $region20: #{policy_forward.1} parent=1 // pred_region
      _
    $region21: #{policy_forward.1} parent=1 // pred_fallthru
      _
    %299 = vsyncpa [#allocation3], 1

</llo_original>
